<compile_context>
chip_gen: v7x
topology: tpu7x:2x2x1
jax: 0.10.0
libtpu: 0.0.40
codegen_flags: <defaults>
</compile_context>

<pallas_src>
import functools

import jax
import jax.numpy as jnp
from jax import lax
from jax.experimental import pallas as pl
from jax.experimental.pallas import tpu as pltpu


_MAX_BLOCK_ROWS = 1024                   # mem-bound plateau is ~512-1024 rows


def _vmem_budget():
    """(scoped vmem limit, tile byte budget), adapted to the chip generation."""
    capacity = 128 * 1024 * 1024
    try:
        capacity = int(pltpu.get_tpu_info().vmem_capacity_bytes)
    except Exception:                     # off-TPU tracing / older jax: fall back
        pass
    limit = min(48 * 1024 * 1024, capacity // 2)    # 48 MiB v5e/v6e, 32 MiB v7x
    tile_budget = (limit * 45) // 100
    return limit, tile_budget


def _choose_block_rows(n, c, itemsize, tile_budget):
    """Largest row tile that keeps pipeline buffers + f32 temps in budget."""
    # Per tile row: 2 logits inputs x 2 pipeline buffers (wire dtype), roughly
    # 10 live f32 (rows, C) temporaries, plus the lane-padded labels stream.
    per_row_bytes = (2 * 2 * itemsize + 10 * 4) * c + 1024
    rows = tile_budget // max(per_row_bytes, 1)
    rows = int(min(rows, _MAX_BLOCK_ROWS, n))
    return max(rows, 1)


def _pela_kernel(*refs, temperature: float, n_rows: int, block_rows: int,
                 compute_ce: bool, ragged: bool):
    """Writes the per-tile KL sum (and CE sum) as (1,1,1) partials."""
    if compute_ce:
        student_ref, teacher_ref, labels_ref, kl_ref, ce_ref = refs
    else:
        student_ref, teacher_ref, kl_ref = refs
        labels_ref = ce_ref = None

    s = student_ref[...].astype(jnp.float32)          # (R, C)
    t = teacher_ref[...].astype(jnp.float32)          # (R, C)
    inv_temp = jnp.float32(1.0 / temperature)
    temp = jnp.float32(temperature)

    # log_softmax(student / T) pieces (s_logp itself is never materialized).
    s_t = s * inv_temp
    s_shift = s_t - jnp.max(s_t, axis=-1, keepdims=True)
    s_lse = jnp.log(jnp.sum(jnp.exp(s_shift), axis=-1, keepdims=True))

    # Teacher tempered softmax with the KL folded into the reduction:
    #   kl_row = sum_c t_exp*(t_shift - s_shift)/t_sum + s_lse - log(t_sum)
    t_t = t * inv_temp
    t_shift = t_t - jnp.max(t_t, axis=-1, keepdims=True)
    t_exp = jnp.exp(t_shift)
    t_sum = jnp.sum(t_exp, axis=-1, keepdims=True)
    diff = jnp.sum(t_exp * (t_shift - s_shift), axis=-1, keepdims=True)
    kl_rows = diff * pl.reciprocal(t_sum, approx=False) + s_lse - jnp.log(t_sum)

    row_valid = None
    if ragged:
        # Ragged last tile: rows past the true batch size contain undefined
        # data (no wrapper-side padding of the logits), mask them exactly.
        step = pl.program_id(0)
        row_ids = step * block_rows + lax.broadcasted_iota(
            jnp.int32, kl_rows.shape, 0)
        row_valid = row_ids < n_rows
        kl_rows = jnp.where(row_valid, kl_rows, 0.0)

    kl_ref[...] = jnp.reshape(jnp.sum(kl_rows), (1, 1, 1))

    if compute_ce:
        labels = labels_ref[...]                       # (R, 1) int32
        # Cross-entropy on the un-tempered logits, reusing the tempered shift:
        # max(s) == T * max(s/T)  =>  s - max(s) == T * s_shift.
        lse1 = jnp.log(jnp.sum(jnp.exp(s_shift * temp), axis=-1, keepdims=True))
        class_ids = lax.broadcasted_iota(jnp.int32, s.shape, 1)   # (R, C)
        picked = jnp.sum(jnp.where(class_ids == labels, s_shift, 0.0),
                         axis=-1, keepdims=True)
        ce_rows = lse1 - temp * picked                  # (R, 1)
        if ragged:
            ce_rows = jnp.where(row_valid, ce_rows, 0.0)
        ce_ref[...] = jnp.reshape(jnp.sum(ce_rows), (1, 1, 1))


def _pela_partials(student, teacher, labels_col, *, temperature, block_rows,
                   compute_ce, vmem_limit):
    n, c = student.shape
    n_tiles = pl.cdiv(n, block_rows)
    ragged = (n % block_rows) != 0

    kernel = functools.partial(_pela_kernel,
                               temperature=float(temperature),
                               n_rows=n, block_rows=block_rows,
                               compute_ce=compute_ce, ragged=ragged)

    logits_spec = pl.BlockSpec((block_rows, c), lambda i: (i, 0))
    part_spec = pl.BlockSpec((1, 1, 1), lambda i: (i, 0, 0))
    part_shape = jax.ShapeDtypeStruct((n_tiles, 1, 1), jnp.float32)

    compiler_params = pltpu.CompilerParams(
        dimension_semantics=("parallel",),   # shards across TCs on v7x
        vmem_limit_bytes=vmem_limit,
    )

    if compute_ce:
        kl_p, ce_p = pl.pallas_call(
            kernel,
            out_shape=(part_shape, part_shape),
            grid_spec=pltpu.PrefetchScalarGridSpec(
                num_scalar_prefetch=0,
                grid=(n_tiles,),
                in_specs=[logits_spec, logits_spec,
                          pl.BlockSpec((block_rows, 1), lambda i: (i, 0))],
                out_specs=[part_spec, part_spec]),
            compiler_params=compiler_params,
        )(student, teacher, labels_col)
        return kl_p, ce_p

    kl_p = pl.pallas_call(
        kernel,
        out_shape=part_shape,
        grid_spec=pltpu.PrefetchScalarGridSpec(
            num_scalar_prefetch=0,
            grid=(n_tiles,),
            in_specs=[logits_spec, logits_spec],
            out_specs=part_spec),
        compiler_params=compiler_params,
    )(student, teacher)
    return kl_p, None


def pela_distillation_loss(student_logits, teacher_logits, labels=None,
                           *, alpha=0.5, temperature=4.0, block_rows=None):
    """JAX/Pallas equivalent of PELADistillationLoss.forward."""
    n, c = student_logits.shape
    compute_ce = labels is not None
    itemsize = jnp.dtype(student_logits.dtype).itemsize

    vmem_limit, tile_budget = _vmem_budget()
    if block_rows is None:
        block_rows = _choose_block_rows(n, c, itemsize, tile_budget)
    block_rows = int(block_rows)

    # Sublane packing of the wire dtype: 8 rows f32, 16 bf16, 32 int8.
    pack = max(8, 32 // max(itemsize, 1))
    if block_rows >= n:
        block_rows = n          # full-extent block: no alignment constraint
    else:
        block_rows = max(pack, (block_rows // pack) * pack)

    labels_col = None
    if compute_ce:
        labels_col = labels.astype(jnp.int32).reshape(n, 1)

    kl_p, ce_p = _pela_partials(student_logits, teacher_logits, labels_col,
                                temperature=temperature,
                                block_rows=block_rows,
                                compute_ce=compute_ce,
                                vmem_limit=vmem_limit)

    inv_n = jnp.float32(1.0 / n)
    # reduction='batchmean': sum over all elements / batch size, then * T^2.
    distillation_loss = jnp.sum(kl_p) * inv_n * jnp.float32(temperature) ** 2

    if compute_ce:
        task_loss = jnp.sum(ce_p) * inv_n
        return alpha * task_loss + (1.0 - alpha) * distillation_loss
    return distillation_loss


def _reference_loss(student, teacher, labels, alpha, temperature):
    """Pure-JAX reference mirroring the PyTorch forward (sanity check)."""
    s_logp = jax.nn.log_softmax(student / temperature, axis=-1)
    t_p = jax.nn.softmax(teacher / temperature, axis=-1)
    kl = jnp.sum(t_p * (jnp.log(t_p) - s_logp)) / student.shape[0]
    distill = kl * temperature ** 2
    if labels is None:
        return distill
    logp1 = jax.nn.log_softmax(student, axis=-1)
    ce = -jnp.mean(jnp.take_along_axis(logp1, labels[:, None], axis=-1))
    return alpha * ce + (1.0 - alpha) * distill


if __name__ == "__main__":
    key = jax.random.PRNGKey(0)
    k1, k2, k3 = jax.random.split(key, 3)

    batch, num_classes = 8, 128
    student_logits = jax.random.normal(k1, (batch, num_classes), dtype=jnp.float32)
    teacher_logits = jax.random.normal(k2, (batch, num_classes), dtype=jnp.float32)
    labels = jax.random.randint(k3, (batch,), 0, num_classes, dtype=jnp.int32)

    # Distillation + task loss.
    loss = jax.block_until_ready(
        pela_distillation_loss(student_logits, teacher_logits, labels,
                               alpha=0.5, temperature=4.0))
    ref = _reference_loss(student_logits, teacher_logits, labels, 0.5, 4.0)
    assert jnp.allclose(loss, ref, rtol=1e-4, atol=1e-5), (loss, ref)

    # labels=None branch: CE path and labels stream are compiled out.
    loss_nl = jax.block_until_ready(
        pela_distillation_loss(student_logits, teacher_logits, None,
                               alpha=0.5, temperature=4.0))
    ref_nl = _reference_loss(student_logits, teacher_logits, None, 0.5, 4.0)
    assert jnp.allclose(loss_nl, ref_nl, rtol=1e-4, atol=1e-5), (loss_nl, ref_nl)

    # Multi-tile grid with a ragged last tile (20 rows, block_rows=8): exercises
    # the in-kernel row mask and the per-tile partial outputs (no padding copy).
    k4, k5, k6 = jax.random.split(jax.random.PRNGKey(1), 3)
    batch2 = 20
    student2 = jax.random.normal(k4, (batch2, num_classes), dtype=jnp.float32)
    teacher2 = jax.random.normal(k5, (batch2, num_classes), dtype=jnp.float32)
    labels2 = jax.random.randint(k6, (batch2,), 0, num_classes, dtype=jnp.int32)

    loss2 = jax.block_until_ready(
        pela_distillation_loss(student2, teacher2, labels2,
                               alpha=0.3, temperature=2.0, block_rows=8))
    ref2 = _reference_loss(student2, teacher2, labels2, 0.3, 2.0)
    assert jnp.allclose(loss2, ref2, rtol=1e-4, atol=1e-5), (loss2, ref2)

    loss3 = jax.block_until_ready(
        pela_distillation_loss(student2, teacher2, None,
                               alpha=0.3, temperature=2.0, block_rows=8))
    ref3 = _reference_loss(student2, teacher2, None, 0.3, 2.0)
    assert jnp.allclose(loss3, ref3, rtol=1e-4, atol=1e-5), (loss3, ref3)

    # Single full-extent tile whose row count (20) is not a multiple of 8:
    # block_shape equal to the full array dims is always legal.
    loss4 = jax.block_until_ready(
        pela_distillation_loss(student2, teacher2, labels2,
                               alpha=0.5, temperature=4.0))
    ref4 = _reference_loss(student2, teacher2, labels2, 0.5, 4.0)
    assert jnp.allclose(loss4, ref4, rtol=1e-4, atol=1e-5), (loss4, ref4)

    print("KERNEL_OK")
</pallas_src>

<mosaic_0001>
module attributes {stable_mosaic.version = 11 : i64} {
  func.func @_pela_kernel(%arg0: i32, %arg1: memref<8x128xf32, #tpu.memory_space<vmem>>, %arg2: memref<8x128xf32, #tpu.memory_space<vmem>>, %arg3: memref<8x1xi32, #tpu.memory_space<vmem>>, %arg4: memref<1x1x1xf32, #tpu.memory_space<vmem>>, %arg5: memref<1x1x1xf32, #tpu.memory_space<vmem>>) attributes {dimension_semantics = [#tpu.dimension_semantics<parallel>], iteration_bounds = array<i64: 1>, scalar_prefetch = 0 : i64, scratch_operands = 0 : i64, tpu.core_type = #tpu.core_type<tc>, window_params = [{transform_indices = @transform_0, window_bounds = array<i64: 8, 128>}, {transform_indices = @transform_1, window_bounds = array<i64: 8, 128>}, {transform_indices = @transform_2, window_bounds = array<i64: 8, 1>}, {transform_indices = @transform_3, window_bounds = array<i64: 1, 1, 1>}, {transform_indices = @transform_4, window_bounds = array<i64: 1, 1, 1>}]} {
    %c0 = arith.constant 0 : index
    %c0_0 = arith.constant 0 : index
    %0 = vector.load %arg1[%c0, %c0_0] : memref<8x128xf32, #tpu.memory_space<vmem>>, vector<8x128xf32>
    %c0_1 = arith.constant 0 : index
    %c0_2 = arith.constant 0 : index
    %1 = vector.load %arg2[%c0_1, %c0_2] : memref<8x128xf32, #tpu.memory_space<vmem>>, vector<8x128xf32>
    %cst = arith.constant 2.500000e-01 : f32
    %2 = vector.broadcast %cst : f32 to vector<8x128xf32>
    %3 = arith.mulf %0, %2 : vector<8x128xf32>
    %cst_3 = arith.constant dense<0xFF800000> : vector<8xf32>
    %4 = vector.multi_reduction <maximumf>, %3, %cst_3 [1] : vector<8x128xf32> to vector<8xf32>
    %5 = vector.shape_cast %4 : vector<8xf32> to vector<8x1xf32>
    %6 = vector.broadcast %5 : vector<8x1xf32> to vector<8x128xf32>
    %7 = arith.subf %3, %6 : vector<8x128xf32>
    %8 = math.exp %7 : vector<8x128xf32>
    %cst_4 = arith.constant dense<0.000000e+00> : vector<8xf32>
    %9 = vector.multi_reduction <add>, %8, %cst_4 [1] : vector<8x128xf32> to vector<8xf32>
    %10 = vector.shape_cast %9 : vector<8xf32> to vector<8x1xf32>
    %11 = math.log %10 : vector<8x1xf32>
    %cst_5 = arith.constant 2.500000e-01 : f32
    %12 = vector.broadcast %cst_5 : f32 to vector<8x128xf32>
    %13 = arith.mulf %1, %12 : vector<8x128xf32>
    %cst_6 = arith.constant dense<0xFF800000> : vector<8xf32>
    %14 = vector.multi_reduction <maximumf>, %13, %cst_6 [1] : vector<8x128xf32> to vector<8xf32>
    %15 = vector.shape_cast %14 : vector<8xf32> to vector<8x1xf32>
    %16 = vector.broadcast %15 : vector<8x1xf32> to vector<8x128xf32>
    %17 = arith.subf %13, %16 : vector<8x128xf32>
    %18 = math.exp %17 : vector<8x128xf32>
    %cst_7 = arith.constant dense<0.000000e+00> : vector<8xf32>
    %19 = vector.multi_reduction <add>, %18, %cst_7 [1] : vector<8x128xf32> to vector<8xf32>
    %20 = vector.shape_cast %19 : vector<8xf32> to vector<8x1xf32>
    %21 = arith.subf %17, %7 : vector<8x128xf32>
    %22 = arith.mulf %18, %21 : vector<8x128xf32>
    %cst_8 = arith.constant dense<0.000000e+00> : vector<8xf32>
    %23 = vector.multi_reduction <add>, %22, %cst_8 [1] : vector<8x128xf32> to vector<8xf32>
    %24 = vector.shape_cast %23 : vector<8xf32> to vector<8x1xf32>
    %25 = tpu.reciprocal %20 : vector<8x1xf32> -> vector<8x1xf32>
    %26 = arith.mulf %24, %25 : vector<8x1xf32>
    %27 = arith.addf %26, %11 : vector<8x1xf32>
    %28 = math.log %20 : vector<8x1xf32>
    %29 = arith.subf %27, %28 : vector<8x1xf32>
    %30 = vector.shape_cast %29 : vector<8x1xf32> to vector<1x8x1xf32>
    %cst_9 = arith.constant dense<0.000000e+00> : vector<1xf32>
    %31 = vector.multi_reduction <add>, %30, %cst_9 [1, 2] : vector<1x8x1xf32> to vector<1xf32>
    %32 = vector.shape_cast %31 : vector<1xf32> to vector<1x1x1xf32>
    %33 = vector.extract %32[0, 0, 0] : f32 from vector<1x1x1xf32>
    %34 = vector.broadcast %33 : f32 to vector<1x1x1xf32>
    %c0_10 = arith.constant 0 : index
    %c0_11 = arith.constant 0 : index
    %c0_12 = arith.constant 0 : index
    %35 = vector.load %arg4[%c0_10, %c0_11, %c0_12] : memref<1x1x1xf32, #tpu.memory_space<vmem>>, vector<1x1x1xf32>
    tpu.vector_store %arg4[%c0_10, %c0_11, %c0_12], %34 {strides = array<i32>} : memref<1x1x1xf32, #tpu.memory_space<vmem>>, vector<1x1x1xf32>,
    %c0_13 = arith.constant 0 : index
    %c0_14 = arith.constant 0 : index
    %36 = vector.load %arg3[%c0_13, %c0_14] : memref<8x1xi32, #tpu.memory_space<vmem>>, vector<8x1xi32>
    %cst_15 = arith.constant 4.000000e+00 : f32
    %37 = vector.broadcast %cst_15 : f32 to vector<8x128xf32>
    %38 = arith.mulf %7, %37 : vector<8x128xf32>
    %39 = math.exp %38 : vector<8x128xf32>
    %cst_16 = arith.constant dense<0.000000e+00> : vector<8xf32>
    %40 = vector.multi_reduction <add>, %39, %cst_16 [1] : vector<8x128xf32> to vector<8xf32>
    %41 = vector.shape_cast %40 : vector<8xf32> to vector<8x1xf32>
    %42 = math.log %41 : vector<8x1xf32>
    %43 = tpu.iota {dimensions = array<i32: 1>} : vector<8x128xi32>
    %44 = vector.broadcast %36 : vector<8x1xi32> to vector<8x128xi32>
    %45 = arith.cmpi eq, %43, %44 : vector<8x128xi32>
    %cst_17 = arith.constant 0.000000e+00 : f32
    %46 = vector.broadcast %cst_17 : f32 to vector<8x128xf32>
    %47 = arith.select %45, %7, %46 : vector<8x128xi1>, vector<8x128xf32>
    %cst_18 = arith.constant dense<0.000000e+00> : vector<8xf32>
    %48 = vector.multi_reduction <add>, %47, %cst_18 [1] : vector<8x128xf32> to vector<8xf32>
    %49 = vector.shape_cast %48 : vector<8xf32> to vector<8x1xf32>
    %cst_19 = arith.constant 4.000000e+00 : f32
    %50 = vector.broadcast %cst_19 : f32 to vector<8x1xf32>
    %51 = arith.mulf %50, %49 : vector<8x1xf32>
    %52 = arith.subf %42, %51 : vector<8x1xf32>
    %53 = vector.shape_cast %52 : vector<8x1xf32> to vector<1x8x1xf32>
    %cst_20 = arith.constant dense<0.000000e+00> : vector<1xf32>
    %54 = vector.multi_reduction <add>, %53, %cst_20 [1, 2] : vector<1x8x1xf32> to vector<1xf32>
    %55 = vector.shape_cast %54 : vector<1xf32> to vector<1x1x1xf32>
    %56 = vector.extract %55[0, 0, 0] : f32 from vector<1x1x1xf32>
    %57 = vector.broadcast %56 : f32 to vector<1x1x1xf32>
    %c0_21 = arith.constant 0 : index
    %c0_22 = arith.constant 0 : index
    %c0_23 = arith.constant 0 : index
    %58 = vector.load %arg5[%c0_21, %c0_22, %c0_23] : memref<1x1x1xf32, #tpu.memory_space<vmem>>, vector<1x1x1xf32>
    tpu.vector_store %arg5[%c0_21, %c0_22, %c0_23], %57 {strides = array<i32>} : memref<1x1x1xf32, #tpu.memory_space<vmem>>, vector<1x1x1xf32>,
    return
  }
  func.func @transform_0(%arg0: i32) -> (i32, i32) {
    %c0_i32 = arith.constant 0 : i32
    %c0_i32_0 = arith.constant 0 : i32
    return %arg0, %c0_i32 : i32, i32
  }
  func.func @transform_1(%arg0: i32) -> (i32, i32) {
    %c0_i32 = arith.constant 0 : i32
    %c0_i32_0 = arith.constant 0 : i32
    return %arg0, %c0_i32 : i32, i32
  }
  func.func @transform_2(%arg0: i32) -> (i32, i32) {
    %c0_i32 = arith.constant 0 : i32
    %c0_i32_0 = arith.constant 0 : i32
    return %arg0, %c0_i32 : i32, i32
  }
  func.func @transform_3(%arg0: i32) -> (i32, i32, i32) {
    %c0_i32 = arith.constant 0 : i32
    %c0_i32_0 = arith.constant 0 : i32
    %c0_i32_1 = arith.constant 0 : i32
    return %arg0, %c0_i32, %c0_i32_0 : i32, i32, i32
  }
  func.func @transform_4(%arg0: i32) -> (i32, i32, i32) {
    %c0_i32 = arith.constant 0 : i32
    %c0_i32_0 = arith.constant 0 : i32
    %c0_i32_1 = arith.constant 0 : i32
    return %arg0, %c0_i32, %c0_i32_0 : i32, i32, i32
  }
}

</mosaic_0001>

<llo_original>
// kernel: tpu_custom_call.1
$region0: #{tpu_custom_call.1}
  #allocation0 [shape = 'u32[]', space=smem, size = 0x4, offset = 0x4, fixed_abs, tag = 'smem constant byte address 0x4 - core index']
  #allocation1 [shape = 'u32[144,128]{1,0:T(1,128)}', space=vmem, size = 0x12000, scoped, tag = 'internal scratch']
  %s0 = inlined_call_operand.vmem [shape: f32[8,128], index: 0, kind: input, shape index: {}]
  %s1 = inlined_call_operand.hbm [shape: f32[8,128], index: 1, kind: input, shape index: {}]
  %s2 = inlined_call_operand.vmem [shape: s32[8,1], index: 2, kind: input, shape index: {}]
  %s3 = inlined_call_operand.hbm [shape: f32[1,1,1], index: 3, kind: output, shape index: {0}]
  %s4 = inlined_call_operand.hbm [shape: f32[1,1,1], index: 4, kind: output, shape index: {1}]
  %5 = xla_tuple %s3, %s4
  %s6 = sld [smem:[#allocation0]]
  $region34: #{tpu_custom_call.1} parent=0
    _
  %s8 = ssub.s32 1, %s6
  %s9 = scalar_select 0, %s8, %s6
  $region1: #{tpu_custom_call.1} parent=0
    #allocation2 [shape = 'u8[4096]{0}', space=vmem, size = 0x1000, scoped, tag = 'input window, operand 1, single buffered']
    #allocation3 [shape = 's32[1]{0}', space=sflag, size = 0x4, scoped, tag = 'scoped memory for tpu_custom_call.1']
    #allocation4 [shape = 's32[1]{0}', space=sflag, size = 0x4, scoped, tag = 'scoped memory for tpu_custom_call.1']
    #allocation5 [shape = 'u8[512]{0}', space=vmem, size = 0x400, scoped, tag = 'output window, operand 0, single buffered']
    #allocation6 [shape = 'u8[512]{0}', space=vmem, size = 0x400, scoped, tag = 'output window, operand 1, single buffered']
    #allocation7 [shape = 's32[1]{0}', space=sflag, size = 0x4, scoped, tag = 'scoped memory for tpu_custom_call.1']
    %10 = vsyncpa [#allocation3], 0
    %11 = vsyncpa [#allocation4], 0
    %12 = vsyncpa [#allocation7], 0
    // Predicated region
    $region2: #{tpu_custom_call.1} parent=1 // pred_check
      _
    $region3: #{tpu_custom_call.1} parent=1 // pred_check_branch
      %14 = sbr.rel (0) target = $region5
    $region4: #{tpu_custom_call.1} parent=1 // pred_region
      _
    $region5: #{tpu_custom_call.1} parent=1 // pred_fallthru
      _
    // Predicated region
    $region6: #{tpu_custom_call.1} parent=1 // pred_check
      _
    $region7: #{tpu_custom_call.1} parent=1 // pred_check_branch
      %16 = sbr.rel (0) target = $region9
    $region8: #{tpu_custom_call.1} parent=1 // pred_region
      %s18 = ssub.s32 128, 128
      %19 = vsyncadd [#allocation3], %s18
      %s21 = sshll.u32 [#allocation2], 4
      %s22 = int_to_ptr.vmem [resolvable:$true] %s21
      %24 = dma.hbm_to_vmem [thread:$0]  %s1, 128, %s22, [#allocation3]
    $region9: #{tpu_custom_call.1} parent=1 // pred_fallthru
      _
    // Predicated region
    $region10: #{tpu_custom_call.1} parent=1 // pred_check
      _
    $region11: #{tpu_custom_call.1} parent=1 // pred_check_branch
      %26 = sbr.rel (0) target = $region13
    $region12: #{tpu_custom_call.1} parent=1 // pred_region
      _
    $region13: #{tpu_custom_call.1} parent=1 // pred_fallthru
      _
    // Predicated region
    $region14: #{tpu_custom_call.1} parent=1 // pred_check
      _
    $region15: #{tpu_custom_call.1} parent=1 // pred_check_branch
      %28 = sbr.rel (0) target = $region17
    $region16: #{tpu_custom_call.1} parent=1 // pred_region
      %29 = dma.done [#allocation3], 128
    $region17: #{tpu_custom_call.1} parent=1 // pred_fallthru
      _
    %v30 = vld [vmem:[%s0] sm:$0xff]
    %v31 = vld [vmem:[#allocation2] sm:$0xff]
    %v32 = vmul.f32 %v30, 0.25
    %33 = vmax.xlane.f32.xlu0 %v32
    %v34 = vpop.xlane.xlu0 %33
    %v35 = vsub.f32 %v32, %v34
    %v36 = vmul.f32 %v35, 1.442695
    %v37 = vpow.pop %v36
    %38 = vadd.xlane.f32.xlu0 %v37
    %v39 = vpop.xlane.xlu0 %38
    %v40 = vlog2.pop %v39
    %v41 = vmul.f32 %v40, 0.6931472
    %v42 = vmul.f32 %v31, 0.25
    %43 = vmax.xlane.f32.xlu0 %v42
    %v44 = vpop.xlane.xlu0 %43
    %v45 = vsub.f32 %v42, %v44
    %v46 = vmul.f32 %v45, 1.442695
    %v47 = vpow.pop %v46
    %48 = vadd.xlane.f32.xlu0 %v47
    %v49 = vpop.xlane.xlu0 %48
    %v50 = vsub.f32 %v45, %v35
    %v51 = vmul.f32 %v47, %v50
    %52 = vadd.xlane.f32.xlu0 %v51
    %v53 = vpop.xlane.xlu0 %52
    %v54 = vrcp.pop %v49
    %v55 = vmul.f32 %v53, %v54
    %v56 = vadd.f32 %v55, %v41
    %v57 = vlog2.pop %v49
    %v58 = vmul.f32 %v57, 0.6931472
    %v59 = vsub.f32 %v56, %v58
    %vm60 = vcmask 7168
    %v61 = vsel %vm60, %v59, 0.0
    %62 = vadd.xlane.f32.xlu0 %v61
    %v63 = vpop.xlane.xlu0 %62
    %v64 = vrot.slane %v63, 4
    %v65 = vadd.f32 %v63, %v64
    %v66 = vrot.slane %v65, 2
    %v67 = vadd.f32 %v65, %v66
    %v68 = vrot.slane %v67, 1
    %v69 = vadd.f32 %v67, %v68
    %s70 = vtos %v69
    %v71 = vstv %s70
    %vm72 = vcmask 0
    %73 = vst.msk [vmem:[#allocation5] sm:$0x1] %vm72, %v71
    %v74 = vld [vmem:[%s2] sm:$0xff]
    %v75 = vmul.f32 %v35, 4.0
    %v76 = vmul.f32 %v75, 1.442695
    %v77 = vpow.pop %v76
    %78 = vadd.xlane.f32.xlu0 %v77
    %v79 = vpop.xlane.xlu0 %78
    %v80 = vlog2.pop %v79
    %v81 = vmul.f32 %v80, 0.6931472
    %v82 = vlaneseq
    %v83 = vand.u32 %v82, 127
    %84 = vset.pattern.permute.xlu0 0
    %85 = vperm.xlu0 %84, %v74
    %v86 = vpop.permute.xlu0 %85
    %vm87 = vcmp.eq.s32.totalorder %v83, %v86
    %v88 = vsel %vm87, %v35, 0.0
    %89 = vadd.xlane.f32.xlu0 %v88
    %v90 = vpop.xlane.xlu0 %89
    %v91 = vmul.f32 %v90, 4.0
    %v92 = vsub.f32 %v81, %v91
    %v93 = vsel %vm60, %v92, 0.0
    %94 = vadd.xlane.f32.xlu0 %v93
    %v95 = vpop.xlane.xlu0 %94
    %v96 = vrot.slane %v95, 4
    %v97 = vadd.f32 %v95, %v96
    %v98 = vrot.slane %v97, 2
    %v99 = vadd.f32 %v97, %v98
    %v100 = vrot.slane %v99, 1
    %v101 = vadd.f32 %v99, %v100
    %s102 = vtos %v101
    %v103 = vstv %s102
    %104 = vst.msk [vmem:[#allocation6] sm:$0x1] %vm72, %v103
    // Predicated region
    $region18: #{tpu_custom_call.1} parent=1 // pred_check
      _
    $region19: #{tpu_custom_call.1} parent=1 // pred_check_branch
      %106 = sbr.rel (0) target = $region21
    $region20: #{tpu_custom_call.1} parent=1 // pred_region
      %s108 = ssub.s32 16, 16
      %109 = vsyncadd [#allocation4], %s108
      %s111 = sshll.u32 [#allocation5], 4
      %s112 = int_to_ptr.vmem [resolvable:$true] %s111
      %114 = dma.vmem_to_hbm [thread:$0]  %s112, 16, %s3, [#allocation4]
    $region21: #{tpu_custom_call.1} parent=1 // pred_fallthru
      _
    // Predicated region
    $region22: #{tpu_custom_call.1} parent=1 // pred_check
      _
    $region23: #{tpu_custom_call.1} parent=1 // pred_check_branch
      %116 = sbr.rel (0) target = $region25
    $region24: #{tpu_custom_call.1} parent=1 // pred_region
      %s118 = ssub.s32 16, 16
      %119 = vsyncadd [#allocation7], %s118
      %s121 = sshll.u32 [#allocation6], 4
      %s122 = int_to_ptr.vmem [resolvable:$true] %s121
      %124 = dma.vmem_to_hbm [thread:$0]  %s122, 16, %s4, [#allocation7]
    $region25: #{tpu_custom_call.1} parent=1 // pred_fallthru
      _
    // Predicated region
    $region26: #{tpu_custom_call.1} parent=1 // pred_check
      _
    $region27: #{tpu_custom_call.1} parent=1 // pred_check_branch
      %126 = sbr.rel (0) target = $region29
    $region28: #{tpu_custom_call.1} parent=1 // pred_region
      %127 = dma.done [#allocation4], 16
    $region29: #{tpu_custom_call.1} parent=1 // pred_fallthru
      _
    // Predicated region
    $region30: #{tpu_custom_call.1} parent=1 // pred_check
      _
    $region31: #{tpu_custom_call.1} parent=1 // pred_check_branch
      %129 = sbr.rel (0) target = $region33
    $region32: #{tpu_custom_call.1} parent=1 // pred_region
      %130 = dma.done [#allocation7], 16
    $region33: #{tpu_custom_call.1} parent=1 // pred_fallthru
      _
    %131 = vsyncpa [#allocation3], 1
    %132 = vsyncpa [#allocation4], 1
    %133 = vsyncpa [#allocation7], 1

</llo_original>
